<compile_context>
chip_gen: v7x
topology: tpu7x:2x2x1
jax: 0.10.0
libtpu: 0.0.40
codegen_flags: <defaults>
</compile_context>

<pallas_src>
import math

import jax
import jax.numpy as jnp
from jax.experimental import pallas as pl
from jax.experimental.pallas import tpu as pltpu

IN_FEATURES = 1024
OUT_FEATURES = 64


def _linear_kernel(x_ref, w_ref, b_ref, o_ref):
    # x_ref: (tm, 1024)  w_ref: (1024, 64)  b_ref: (1, 64)  o_ref: (tm, 64)
    acc = jnp.dot(x_ref[...], w_ref[...], preferred_element_type=jnp.float32)
    o_ref[...] = (acc + b_ref[...].astype(jnp.float32)).astype(o_ref.dtype)


def _sublane_multiple(dtype) -> int:
    # Sub-32-bit dtypes pack along sublanes: f32 -> 8, bf16 -> 16, int8 -> 32.
    return 8 * (4 // jnp.dtype(dtype).itemsize)


def wav_encoder_forward(wav_feature, weight, bias, *, tm=1024):
    """wav_feature: [..., 1024]; weight: [1024, 64]; bias: [64] -> [..., 64]."""
    lead = wav_feature.shape[:-1]
    K = wav_feature.shape[-1]
    assert K == IN_FEATURES
    assert weight.shape == (IN_FEATURES, OUT_FEATURES)
    M = int(math.prod(lead)) if lead else 1
    x2d = wav_feature.reshape(M, K)
    b2d = bias.reshape(1, OUT_FEATURES)

    # Row tile: multiple of the dtype's sublane tile, capped at `tm`, and also
    # capped at ~M/2 so the grid has >= 2 steps whenever M allows — needed for
    # dimension_semantics=("parallel",) to shard across v7x's 2 TensorCores.
    sub = _sublane_multiple(wav_feature.dtype)
    half_rows = pl.cdiv(pl.cdiv(M, 2), sub) * sub
    tm_eff = max(sub, min(tm, half_rows))
    grid_m = pl.cdiv(M, tm_eff)

    itemsize = jnp.dtype(wav_feature.dtype).itemsize
    out = pl.pallas_call(
        _linear_kernel,
        out_shape=jax.ShapeDtypeStruct((M, OUT_FEATURES), wav_feature.dtype),
        grid_spec=pltpu.PrefetchScalarGridSpec(
            num_scalar_prefetch=0,
            grid=(grid_m,),
            in_specs=[
                # x tile: rows tiled, full K (K = 1024 is lane-aligned).
                # Tail block (M % tm_eff != 0) is handled by Pallas clipping.
                pl.BlockSpec((tm_eff, K), lambda i: (i, 0)),
                # Full weight matrix, constant index_map -> resident across
                # grid steps (re-DMA is skipped for unchanged block indices).
                pl.BlockSpec((K, OUT_FEATURES), lambda i: (0, 0)),
                # Full bias row.
                pl.BlockSpec((1, OUT_FEATURES), lambda i: (0, 0)),
            ],
            out_specs=pl.BlockSpec((tm_eff, OUT_FEATURES), lambda i: (i, 0)),
        ),
        compiler_params=pltpu.CompilerParams(
            dimension_semantics=("parallel",),
        ),
        cost_estimate=pl.CostEstimate(
            flops=2 * M * K * OUT_FEATURES,
            transcendentals=0,
            bytes_accessed=(M * K + K * OUT_FEATURES + OUT_FEATURES
                            + M * OUT_FEATURES) * itemsize,
        ),
    )(x2d, weight, b2d)

    return out.reshape(*lead, OUT_FEATURES)


def init_params(key):
    """Deterministic params matching nn.Linear(1024, 64) default init."""
    kw, kb = jax.random.split(key)
    bound = 1.0 / jnp.sqrt(jnp.float32(IN_FEATURES))
    weight = jax.random.uniform(
        kw, (IN_FEATURES, OUT_FEATURES), jnp.float32, -bound, bound
    )
    bias = jax.random.uniform(kb, (OUT_FEATURES,), jnp.float32, -bound, bound)
    return weight, bias


if __name__ == "__main__":
    key = jax.random.PRNGKey(0)
    k_x, k_p = jax.random.split(key)

    B, S = 2, 8
    wav_feature = jax.random.normal(k_x, (B, S, IN_FEATURES), jnp.float32)
    weight, bias = init_params(k_p)

    out = wav_encoder_forward(wav_feature, weight, bias)
    out = jax.block_until_ready(out)

    # Reference check in plain JAX.
    ref = wav_feature @ weight + bias
    assert out.shape == (B, S, OUT_FEATURES)
    assert jnp.allclose(out, ref, atol=1e-3, rtol=1e-3)

    print("KERNEL_OK")
</pallas_src>

<mosaic_0001>
module attributes {stable_mosaic.version = 11 : i64} {
  func.func @_linear_kernel(%arg0: i32, %arg1: memref<8x1024xf32, #tpu.memory_space<vmem>>, %arg2: memref<1024x64xf32, #tpu.memory_space<vmem>>, %arg3: memref<1x64xf32, #tpu.memory_space<vmem>>, %arg4: memref<8x64xf32, #tpu.memory_space<vmem>>) attributes {dimension_semantics = [#tpu.dimension_semantics<parallel>], iteration_bounds = array<i64: 2>, scalar_prefetch = 0 : i64, scratch_operands = 0 : i64, tpu.core_type = #tpu.core_type<tc>, window_params = [{transform_indices = @transform_0, window_bounds = array<i64: 8, 1024>}, {pipeline_mode = #tpu.pipeline_mode<synchronous>, transform_indices = @transform_1, window_bounds = array<i64: 1024, 64>}, {pipeline_mode = #tpu.pipeline_mode<synchronous>, transform_indices = @transform_2, window_bounds = array<i64: 1, 64>}, {transform_indices = @transform_3, window_bounds = array<i64: 8, 64>}]} {
    %c0 = arith.constant 0 : index
    %c0_0 = arith.constant 0 : index
    %0 = vector.load %arg1[%c0, %c0_0] : memref<8x1024xf32, #tpu.memory_space<vmem>>, vector<8x1024xf32>
    %c0_1 = arith.constant 0 : index
    %c0_2 = arith.constant 0 : index
    %1 = vector.load %arg2[%c0_1, %c0_2] : memref<1024x64xf32, #tpu.memory_space<vmem>>, vector<1024x64xf32>
    %cst = arith.constant dense<0.000000e+00> : vector<8x64xf32>
    %2 = tpu.matmul %0, %1, %cst {dimension_numbers = #tpu.dot_dimension_numbers<[1], [0], [0], [1], [0, 0, 1, 1], [], []>} : vector<8x1024xf32>, vector<1024x64xf32>, vector<8x64xf32> -> vector<8x64xf32>
    %c0_3 = arith.constant 0 : index
    %c0_4 = arith.constant 0 : index
    %3 = vector.load %arg3[%c0_3, %c0_4] : memref<1x64xf32, #tpu.memory_space<vmem>>, vector<1x64xf32>
    %4 = vector.broadcast %3 : vector<1x64xf32> to vector<8x64xf32>
    %5 = arith.addf %2, %4 : vector<8x64xf32>
    %c0_5 = arith.constant 0 : index
    %c0_6 = arith.constant 0 : index
    %6 = vector.load %arg4[%c0_5, %c0_6] : memref<8x64xf32, #tpu.memory_space<vmem>>, vector<8x64xf32>
    tpu.vector_store %arg4[%c0_5, %c0_6], %5 {strides = array<i32>} : memref<8x64xf32, #tpu.memory_space<vmem>>, vector<8x64xf32>,
    return
  }
  func.func @transform_0(%arg0: i32) -> (i32, i32) {
    %c0_i32 = arith.constant 0 : i32
    %c0_i32_0 = arith.constant 0 : i32
    return %arg0, %c0_i32 : i32, i32
  }
  func.func @transform_1(%arg0: i32) -> (i32, i32) {
    %c0_i32 = arith.constant 0 : i32
    %c0_i32_0 = arith.constant 0 : i32
    %c0_i32_1 = arith.constant 0 : i32
    return %c0_i32, %c0_i32_0 : i32, i32
  }
  func.func @transform_2(%arg0: i32) -> (i32, i32) {
    %c0_i32 = arith.constant 0 : i32
    %c0_i32_0 = arith.constant 0 : i32
    %c0_i32_1 = arith.constant 0 : i32
    return %c0_i32, %c0_i32_0 : i32, i32
  }
  func.func @transform_3(%arg0: i32) -> (i32, i32) {
    %c0_i32 = arith.constant 0 : i32
    %c0_i32_0 = arith.constant 0 : i32
    return %arg0, %c0_i32 : i32, i32
  }
}

</mosaic_0001>

<llo_original>
// kernel: tpu_custom_call.1
$region0: #{tpu_custom_call.1}
  #allocation0 [shape = 'u32[]', space=smem, size = 0x4, offset = 0x4, fixed_abs, tag = 'smem constant byte address 0x4 - core index']
  #allocation1 [shape = 'u32[144,128]{1,0:T(1,128)}', space=vmem, size = 0x12000, scoped, tag = 'internal scratch']
  %s0 = inlined_call_operand.vmem [shape: f32[16,1024], index: 0, kind: input, shape index: {}]
  %s1 = inlined_call_operand.vmem [shape: f32[1024,64], index: 1, kind: input, shape index: {}]
  %s2 = inlined_call_operand.vmem [shape: f32[1,64], index: 2, kind: input, shape index: {}]
  %s3 = inlined_call_operand.hbm [shape: f32[16,64], index: 3, kind: output, shape index: {}]
  %s4 = sld [smem:[#allocation0]]
  $region45: #{tpu_custom_call.1} parent=0
    _
  %s6 = ssub.s32 1, %s4
  %s7 = scalar_select 0, %s6, %s4
  $region1: #{tpu_custom_call.1} parent=0
    #allocation2 [shape = 'u8[8192]{0}', space=vmem, size = 0x2000, scoped, tag = 'output window, operand 0']
    #allocation3 [shape = 's32[2]{0}', space=sflag, size = 0x8, scoped, tag = 'scoped memory for tpu_custom_call.1']
    %8 = vsyncpa [#allocation3], 0
    %s9 = scalar_lea.sflag [#allocation3], 1
    %10 = vsyncpa %s9, 0
    loop: start=0, step=1, limit=4
    $region2: #{tpu_custom_call.1} parent=1 // loop_pre_header
      _
    $region3: #{tpu_custom_call.1} parent=1 // loop_header
      %s12 = sphi 0, %s16
      %p13 = scmp.ge.s32.totalorder %s12, 4
      %s22 = sphi 0, %s24
      %s25 = sphi 0, %s22
      %s26 = sphi 0, %s25
      %s42 = sphi 0, %s26
      %s46 = sphi 0, %s46
      %s48 = sphi 0, %s46
      %s49 = sphi 0, %s48
      %s63 = sphi 0, %s49
      %s67 = sphi 0, %s67
      %s69 = sphi 0, %s67
      %s70 = sphi 0, %s69
      %s84 = sphi 0, %s70
      %s90 = sphi 0, %s92
      %s93 = sphi 0, %s90
      %s94 = sphi 0, %s93
      %s110 = sphi 0, %s94
    $region4: #{tpu_custom_call.1} parent=1 // loop_header_branch
      %15 = sbr.rel (%p13) target = $region8
    $region5: #{tpu_custom_call.1} parent=1 // loop_body
      %s17 = ssub.s32 %s12, 1
      %s18 = ssub.s32 %s12, 2
      %s19 = sadd.s32 %s12, 1
      %s20 = ssub.s32 %s12, %s19
      %p21 = scmp.eq.s32.totalorder %s20, 0
      %s23 = sadd.s32 %s22, 1
      %s24 = scalar_select %p21, %s22, %s23
      %p27 = pneg %p21
      %p28 = scmp.eq.s32.totalorder %s12, 1
      %p29 = por %p27, %p28
      %p30 = scmp.ne.s32.totalorder %s22, %s25
      %p31 = scmp.eq.s32.totalorder %s12, 0
      %p32 = por %p30, %p31
      %p33 = scmp.ne.s32.totalorder %s22, %s25
      %p34 = scmp.eq.s32.totalorder %s17, 1
      %p35 = por %p33, %p34
      %p36 = scmp.ne.s32.totalorder %s25, %s26
      %p37 = scmp.eq.s32.totalorder %s17, 0
      %p38 = por %p36, %p37
      %p39 = scmp.ne.s32.totalorder %s25, %s26
      %p40 = scmp.eq.s32.totalorder %s18, 1
      %p41 = por %p39, %p40
      %p43 = scmp.ne.s32.totalorder %s26, %s42
      %p44 = scmp.eq.s32.totalorder %s18, 0
      %p45 = por %p43, %p44
      %s47 = sadd.s32 %s46, 1
      %p50 = scmp.eq.s32.totalorder %s12, 1
      %p51 = scmp.ne.s32.totalorder %s46, %s48
      %p52 = scmp.eq.s32.totalorder %s12, 0
      %p53 = por %p51, %p52
      %p54 = scmp.ne.s32.totalorder %s46, %s48
      %p55 = scmp.eq.s32.totalorder %s17, 1
      %p56 = por %p54, %p55
      %p57 = scmp.ne.s32.totalorder %s48, %s49
      %p58 = scmp.eq.s32.totalorder %s17, 0
      %p59 = por %p57, %p58
      %p60 = scmp.ne.s32.totalorder %s48, %s49
      %p61 = scmp.eq.s32.totalorder %s18, 1
      %p62 = por %p60, %p61
      %p64 = scmp.ne.s32.totalorder %s49, %s63
      %p65 = scmp.eq.s32.totalorder %s18, 0
      %p66 = por %p64, %p65
      %s68 = sadd.s32 %s67, 1
      %p71 = scmp.eq.s32.totalorder %s12, 1
      %p72 = scmp.ne.s32.totalorder %s67, %s69
      %p73 = scmp.eq.s32.totalorder %s12, 0
      %p74 = por %p72, %p73
      %p75 = scmp.ne.s32.totalorder %s67, %s69
      %p76 = scmp.eq.s32.totalorder %s17, 1
      %p77 = por %p75, %p76
      %p78 = scmp.ne.s32.totalorder %s69, %s70
      %p79 = scmp.eq.s32.totalorder %s17, 0
      %p80 = por %p78, %p79
      %p81 = scmp.ne.s32.totalorder %s69, %s70
      %p82 = scmp.eq.s32.totalorder %s18, 1
      %p83 = por %p81, %p82
      %p85 = scmp.ne.s32.totalorder %s70, %s84
      %p86 = scmp.eq.s32.totalorder %s18, 0
      %p87 = por %p85, %p86
      %s88 = ssub.s32 %s12, %s19
      %p89 = scmp.eq.s32.totalorder %s88, 0
      %s91 = sadd.s32 %s90, 1
      %s92 = scalar_select %p89, %s90, %s91
      %p95 = pneg %p89
      %p96 = scmp.eq.s32.totalorder %s12, 1
      %p97 = por %p95, %p96
      %p98 = scmp.ne.s32.totalorder %s90, %s93
      %p99 = scmp.eq.s32.totalorder %s12, 0
      %p100 = por %p98, %p99
      %p101 = scmp.ne.s32.totalorder %s90, %s93
      %p102 = scmp.eq.s32.totalorder %s17, 1
      %p103 = por %p101, %p102
      %p104 = scmp.ne.s32.totalorder %s93, %s94
      %p105 = scmp.eq.s32.totalorder %s17, 0
      %p106 = por %p104, %p105
      %p107 = scmp.ne.s32.totalorder %s93, %s94
      %p108 = scmp.eq.s32.totalorder %s18, 1
      %p109 = por %p107, %p108
      %p111 = scmp.ne.s32.totalorder %s94, %s110
      %p112 = scmp.eq.s32.totalorder %s18, 0
      %p113 = por %p111, %p112
      %p114 = scmp.le.s32.totalorder 1, %s12
      %p115 = scmp.lt.s32.totalorder %s12, 3
      %p116 = pnand %p114, %p115
      %p117 = pneg %p116
      // Predicated region
      $region9: #{tpu_custom_call.1} parent=5 // pred_check
        _
      $region10: #{tpu_custom_call.1} parent=5 // pred_check_branch
        %119 = sbr.rel (%p116) target = $region12
      $region11: #{tpu_custom_call.1} parent=5 // pred_region
        %s120 = ssub.s32 %s12, 1
        // Predicated region
        $region13: #{tpu_custom_call.1} parent=11 // pred_check
          %p121 = pneg %p59
        $region14: #{tpu_custom_call.1} parent=11 // pred_check_branch
          %123 = sbr.rel (%p121) target = $region16
        $region15: #{tpu_custom_call.1} parent=11 // pred_region
          _
        $region16: #{tpu_custom_call.1} parent=11 // pred_fallthru
          _
        // Predicated region
        $region17: #{tpu_custom_call.1} parent=11 // pred_check
          %p124 = pneg %p80
        $region18: #{tpu_custom_call.1} parent=11 // pred_check_branch
          %126 = sbr.rel (%p124) target = $region20
        $region19: #{tpu_custom_call.1} parent=11 // pred_region
          _
        $region20: #{tpu_custom_call.1} parent=11 // pred_fallthru
          _
      $region12: #{tpu_custom_call.1} parent=5 // pred_fallthru
        _
      %p127 = scmp.lt.s32.totalorder %s12, 2
      // Predicated region
      $region21: #{tpu_custom_call.1} parent=5 // pred_check
        %p128 = pneg %p127
      $region22: #{tpu_custom_call.1} parent=5 // pred_check_branch
        %130 = sbr.rel (%p128) target = $region24
      $region23: #{tpu_custom_call.1} parent=5 // pred_region
        // Predicated region
        $region25: #{tpu_custom_call.1} parent=23 // pred_check
          %p131 = pneg %p32
        $region26: #{tpu_custom_call.1} parent=23 // pred_check_branch
          %133 = sbr.rel (%p131) target = $region28
        $region27: #{tpu_custom_call.1} parent=23 // pred_region
          %p134 = scmp.lt.s32.totalorder %s12, 1
          %s135 = scalar_select %p134, %s12, 1
          %s136 = smul.addr %s135, 8
          %s137 = smul.addr %s136, 8
          %s138 = scalar_lea.vmem %s0, %s137
        $region28: #{tpu_custom_call.1} parent=23 // pred_fallthru
          _
      $region24: #{tpu_custom_call.1} parent=5 // pred_fallthru
        _
      %p139 = scmp.le.s32.totalorder 1, %s12
      %p140 = scmp.lt.s32.totalorder %s12, 3
      %p141 = pnand %p139, %p140
      %p142 = pneg %p141
      // Predicated region
      $region29: #{tpu_custom_call.1} parent=5 // pred_check
        _
      $region30: #{tpu_custom_call.1} parent=5 // pred_check_branch
        %144 = sbr.rel (%p141) target = $region32
      $region31: #{tpu_custom_call.1} parent=5 // pred_region
        %s145 = ssub.s32 %s12, 1
        %p146 = scmp.lt.s32.totalorder %s17, 1
        %s147 = scalar_select %p146, %s17, 1
        %s148 = smul.addr %s147, 8
        %s149 = smul.addr %s148, 8
        %s150 = scalar_lea.vmem %s0, %s149
        %p151 = pneg %p38
        %p152 = pneg %p35
        %p153 = pneg %p59
        %p154 = pneg %p56
        %p155 = pneg %p80
        %p156 = pneg %p77
        %p157 = pneg %p106
        %p158 = pneg %p103
        %s159 = sand.u32 %s93, 1
        %s160 = scalar_lea.sflag [#allocation3], %s159
        %s161 = sand.u32 %s93, 1
        %s162 = smul.addr %s161, 8
        %s163 = scalar_lea.vmem [#allocation2], %s162
        %p164 = scmp.lt.s32.totalorder %s17, 1
        %s165 = scalar_select %p164, %s17, 1
        %s166 = smul.addr %s165, 8
        %s167 = smul.addr %s166, 8
        %s168 = scalar_lea.vmem %s0, %s167
        %v169 = vld [vmem:[%s168] sm:$0xff]
        %v170 = vld [vmem:[%s168 + $0x8] sm:$0xff]
        %v171 = vld [vmem:[%s168 + $0x10] sm:$0xff]
        %v172 = vld [vmem:[%s168 + $0x18] sm:$0xff]
        %v173 = vld [vmem:[%s168 + $0x20] sm:$0xff]
        %v174 = vld [vmem:[%s168 + $0x28] sm:$0xff]
        %v175 = vld [vmem:[%s168 + $0x30] sm:$0xff]
        %v176 = vld [vmem:[%s168 + $0x38] sm:$0xff]
        %v177 = vld [vmem:[%s1] sm:$0xff]
        %v178 = vld [vmem:[%s1 + $0x8] sm:$0xff]
        %v179 = vld [vmem:[%s1 + $0x10] sm:$0xff]
        %v180 = vld [vmem:[%s1 + $0x18] sm:$0xff]
        %v181 = vld [vmem:[%s1 + $0x20] sm:$0xff]
        %v182 = vld [vmem:[%s1 + $0x28] sm:$0xff]
        %v183 = vld [vmem:[%s1 + $0x30] sm:$0xff]
        %v184 = vld [vmem:[%s1 + $0x38] sm:$0xff]
        %v185 = vld [vmem:[%s1 + $0x40] sm:$0xff]
        %v186 = vld [vmem:[%s1 + $0x48] sm:$0xff]
        %v187 = vld [vmem:[%s1 + $0x50] sm:$0xff]
        %v188 = vld [vmem:[%s1 + $0x58] sm:$0xff]
        %v189 = vld [vmem:[%s1 + $0x60] sm:$0xff]
        %v190 = vld [vmem:[%s1 + $0x68] sm:$0xff]
        %v191 = vld [vmem:[%s1 + $0x70] sm:$0xff]
        %v192 = vld [vmem:[%s1 + $0x78] sm:$0xff]
        %v193 = vld [vmem:[%s1 + $0x80] sm:$0xff]
        %v194 = vld [vmem:[%s1 + $0x88] sm:$0xff]
        %v195 = vld [vmem:[%s1 + $0x90] sm:$0xff]
        %v196 = vld [vmem:[%s1 + $0x98] sm:$0xff]
        %v197 = vld [vmem:[%s1 + $0xa0] sm:$0xff]
        %v198 = vld [vmem:[%s1 + $0xa8] sm:$0xff]
        %v199 = vld [vmem:[%s1 + $0xb0] sm:$0xff]
        %v200 = vld [vmem:[%s1 + $0xb8] sm:$0xff]
        %v201 = vld [vmem:[%s1 + $0xc0] sm:$0xff]
        %v202 = vld [vmem:[%s1 + $0xc8] sm:$0xff]
        %v203 = vld [vmem:[%s1 + $0xd0] sm:$0xff]
        %v204 = vld [vmem:[%s1 + $0xd8] sm:$0xff]
        %v205 = vld [vmem:[%s1 + $0xe0] sm:$0xff]
        %v206 = vld [vmem:[%s1 + $0xe8] sm:$0xff]
        %v207 = vld [vmem:[%s1 + $0xf0] sm:$0xff]
        %v208 = vld [vmem:[%s1 + $0xf8] sm:$0xff]
        %v209 = vld [vmem:[%s1 + $0x100] sm:$0xff]
        %v210 = vld [vmem:[%s1 + $0x108] sm:$0xff]
        %v211 = vld [vmem:[%s1 + $0x110] sm:$0xff]
        %v212 = vld [vmem:[%s1 + $0x118] sm:$0xff]
        %v213 = vld [vmem:[%s1 + $0x120] sm:$0xff]
        %v214 = vld [vmem:[%s1 + $0x128] sm:$0xff]
        %v215 = vld [vmem:[%s1 + $0x130] sm:$0xff]
        %v216 = vld [vmem:[%s1 + $0x138] sm:$0xff]
        %v217 = vld [vmem:[%s1 + $0x140] sm:$0xff]
        %v218 = vld [vmem:[%s1 + $0x148] sm:$0xff]
        %v219 = vld [vmem:[%s1 + $0x150] sm:$0xff]
        %v220 = vld [vmem:[%s1 + $0x158] sm:$0xff]
        %v221 = vld [vmem:[%s1 + $0x160] sm:$0xff]
        %v222 = vld [vmem:[%s1 + $0x168] sm:$0xff]
        %v223 = vld [vmem:[%s1 + $0x170] sm:$0xff]
        %v224 = vld [vmem:[%s1 + $0x178] sm:$0xff]
        %v225 = vld [vmem:[%s1 + $0x180] sm:$0xff]
        %v226 = vld [vmem:[%s1 + $0x188] sm:$0xff]
        %v227 = vld [vmem:[%s1 + $0x190] sm:$0xff]
        %v228 = vld [vmem:[%s1 + $0x198] sm:$0xff]
        %v229 = vld [vmem:[%s1 + $0x1a0] sm:$0xff]
        %v230 = vld [vmem:[%s1 + $0x1a8] sm:$0xff]
        %v231 = vld [vmem:[%s1 + $0x1b0] sm:$0xff]
        %v232 = vld [vmem:[%s1 + $0x1b8] sm:$0xff]
        %v233 = vld [vmem:[%s1 + $0x1c0] sm:$0xff]
        %v234 = vld [vmem:[%s1 + $0x1c8] sm:$0xff]
        %v235 = vld [vmem:[%s1 + $0x1d0] sm:$0xff]
        %v236 = vld [vmem:[%s1 + $0x1d8] sm:$0xff]
        %v237 = vld [vmem:[%s1 + $0x1e0] sm:$0xff]
        %v238 = vld [vmem:[%s1 + $0x1e8] sm:$0xff]
        %v239 = vld [vmem:[%s1 + $0x1f0] sm:$0xff]
        %v240 = vld [vmem:[%s1 + $0x1f8] sm:$0xff]
        %v241 = vld [vmem:[%s1 + $0x200] sm:$0xff]
        %v242 = vld [vmem:[%s1 + $0x208] sm:$0xff]
        %v243 = vld [vmem:[%s1 + $0x210] sm:$0xff]
        %v244 = vld [vmem:[%s1 + $0x218] sm:$0xff]
        %v245 = vld [vmem:[%s1 + $0x220] sm:$0xff]
        %v246 = vld [vmem:[%s1 + $0x228] sm:$0xff]
        %v247 = vld [vmem:[%s1 + $0x230] sm:$0xff]
        %v248 = vld [vmem:[%s1 + $0x238] sm:$0xff]
        %v249 = vld [vmem:[%s1 + $0x240] sm:$0xff]
        %v250 = vld [vmem:[%s1 + $0x248] sm:$0xff]
        %v251 = vld [vmem:[%s1 + $0x250] sm:$0xff]
        %v252 = vld [vmem:[%s1 + $0x258] sm:$0xff]
        %v253 = vld [vmem:[%s1 + $0x260] sm:$0xff]
        %v254 = vld [vmem:[%s1 + $0x268] sm:$0xff]
        %v255 = vld [vmem:[%s1 + $0x270] sm:$0xff]
        %v256 = vld [vmem:[%s1 + $0x278] sm:$0xff]
        %v257 = vld [vmem:[%s1 + $0x280] sm:$0xff]
        %v258 = vld [vmem:[%s1 + $0x288] sm:$0xff]
        %v259 = vld [vmem:[%s1 + $0x290] sm:$0xff]
        %v260 = vld [vmem:[%s1 + $0x298] sm:$0xff]
        %v261 = vld [vmem:[%s1 + $0x2a0] sm:$0xff]
        %v262 = vld [vmem:[%s1 + $0x2a8] sm:$0xff]
        %v263 = vld [vmem:[%s1 + $0x2b0] sm:$0xff]
        %v264 = vld [vmem:[%s1 + $0x2b8] sm:$0xff]
        %v265 = vld [vmem:[%s1 + $0x2c0] sm:$0xff]
        %v266 = vld [vmem:[%s1 + $0x2c8] sm:$0xff]
        %v267 = vld [vmem:[%s1 + $0x2d0] sm:$0xff]
        %v268 = vld [vmem:[%s1 + $0x2d8] sm:$0xff]
        %v269 = vld [vmem:[%s1 + $0x2e0] sm:$0xff]
        %v270 = vld [vmem:[%s1 + $0x2e8] sm:$0xff]
        %v271 = vld [vmem:[%s1 + $0x2f0] sm:$0xff]
        %v272 = vld [vmem:[%s1 + $0x2f8] sm:$0xff]
        %v273 = vld [vmem:[%s1 + $0x300] sm:$0xff]
        %v274 = vld [vmem:[%s1 + $0x308] sm:$0xff]
        %v275 = vld [vmem:[%s1 + $0x310] sm:$0xff]
        %v276 = vld [vmem:[%s1 + $0x318] sm:$0xff]
        %v277 = vld [vmem:[%s1 + $0x320] sm:$0xff]
        %v278 = vld [vmem:[%s1 + $0x328] sm:$0xff]
        %v279 = vld [vmem:[%s1 + $0x330] sm:$0xff]
        %v280 = vld [vmem:[%s1 + $0x338] sm:$0xff]
        %v281 = vld [vmem:[%s1 + $0x340] sm:$0xff]
        %v282 = vld [vmem:[%s1 + $0x348] sm:$0xff]
        %v283 = vld [vmem:[%s1 + $0x350] sm:$0xff]
        %v284 = vld [vmem:[%s1 + $0x358] sm:$0xff]
        %v285 = vld [vmem:[%s1 + $0x360] sm:$0xff]
        %v286 = vld [vmem:[%s1 + $0x368] sm:$0xff]
        %v287 = vld [vmem:[%s1 + $0x370] sm:$0xff]
        %v288 = vld [vmem:[%s1 + $0x378] sm:$0xff]
        %v289 = vld [vmem:[%s1 + $0x380] sm:$0xff]
        %v290 = vld [vmem:[%s1 + $0x388] sm:$0xff]
        %v291 = vld [vmem:[%s1 + $0x390] sm:$0xff]
        %v292 = vld [vmem:[%s1 + $0x398] sm:$0xff]
        %v293 = vld [vmem:[%s1 + $0x3a0] sm:$0xff]
        %v294 = vld [vmem:[%s1 + $0x3a8] sm:$0xff]
        %v295 = vld [vmem:[%s1 + $0x3b0] sm:$0xff]
        %v296 = vld [vmem:[%s1 + $0x3b8] sm:$0xff]
        %v297 = vld [vmem:[%s1 + $0x3c0] sm:$0xff]
        %v298 = vld [vmem:[%s1 + $0x3c8] sm:$0xff]
        %v299 = vld [vmem:[%s1 + $0x3d0] sm:$0xff]
        %v300 = vld [vmem:[%s1 + $0x3d8] sm:$0xff]
        %v301 = vld [vmem:[%s1 + $0x3e0] sm:$0xff]
        %v302 = vld [vmem:[%s1 + $0x3e8] sm:$0xff]
        %v303 = vld [vmem:[%s1 + $0x3f0] sm:$0xff]
        %v304 = vld [vmem:[%s1 + $0x3f8] sm:$0xff]
        %v305 = vld [vmem:[%s2] sm:$0x1]
        %v307 = vlaneseq
        %v308 = vshrl.u32 %v307, 7
        %v309 = vsub.s32 0, %v308
        %v310 = vrot.slane %v305, %v309
        %312 = vmatprep.subr.mxu0 0.0
        %313 = vmatpush1.msra.mxu0 %v177
        %314 = vmatprep.subr.mxu0 0.0
        %315 = vmatpush1.msra.mxu0 %v178
        %316 = vmatprep.subr.mxu0 0.0
        %317 = vmatpush1.msra.mxu0 %v179
        %318 = vmatprep.subr.mxu0 0.0
        %319 = vmatpush1.msra.mxu0 %v180
        %320 = vmatprep.subr.mxu0 0.0
        %321 = vmatpush1.msra.mxu0 %v181
        %322 = vmatprep.subr.mxu0 0.0
        %323 = vmatpush1.msra.mxu0 %v182
        %324 = vmatprep.subr.mxu0 0.0
        %325 = vmatpush1.msra.mxu0 %v183
        %326 = vmatprep.subr.mxu0 0.0
        %327 = vmatpush1.msra.mxu0 %v184
        %328 = vmatprep.subr.mxu0 0.0
        %329 = vmatpush1.msra.mxu0 %v185
        %330 = vmatprep.subr.mxu0 0.0
        %331 = vmatpush1.msra.mxu0 %v186
        %332 = vmatprep.subr.mxu0 0.0
        %333 = vmatpush1.msra.mxu0 %v187
        %334 = vmatprep.subr.mxu0 0.0
        %335 = vmatpush1.msra.mxu0 %v188
        %336 = vmatprep.subr.mxu0 0.0
        %337 = vmatpush1.msra.mxu0 %v189
        %338 = vmatprep.subr.mxu0 0.0
        %339 = vmatpush1.msra.mxu0 %v190
        %340 = vmatprep.subr.mxu0 0.0
        %341 = vmatpush1.msra.mxu0 %v191
        %342 = vmatprep.subr.mxu0 0.0
        %343 = vmatpush1.msra.mxu0 %v192
        %344 = vmatprep.subr.mxu0 0.0
        %345 = vmatpush1.msra.mxu0 %v193
        %346 = vmatprep.subr.mxu0 0.0
        %347 = vmatpush1.msra.mxu0 %v194
        %348 = vmatprep.subr.mxu0 0.0
        %349 = vmatpush1.msra.mxu0 %v195
        %350 = vmatprep.subr.mxu0 0.0
        %351 = vmatpush1.msra.mxu0 %v196
        %352 = vmatprep.subr.mxu0 0.0
        %353 = vmatpush1.msra.mxu0 %v197
        %354 = vmatprep.subr.mxu0 0.0
        %355 = vmatpush1.msra.mxu0 %v198
        %356 = vmatprep.subr.mxu0 0.0
        %357 = vmatpush1.msra.mxu0 %v199
        %358 = vmatprep.subr.mxu0 0.0
        %359 = vmatpush1.msra.mxu0 %v200
        %360 = vmatprep.subr.mxu0 0.0
        %361 = vmatpush1.msra.mxu0 %v201
        %362 = vmatprep.subr.mxu0 0.0
        %363 = vmatpush1.msra.mxu0 %v202
        %364 = vmatprep.subr.mxu0 0.0
        %365 = vmatpush1.msra.mxu0 %v203
        %366 = vmatprep.subr.mxu0 0.0
        %367 = vmatpush1.msra.mxu0 %v204
        %368 = vmatprep.subr.mxu0 0.0
        %369 = vmatpush1.msra.mxu0 %v205
        %370 = vmatprep.subr.mxu0 0.0
        %371 = vmatpush1.msra.mxu0 %v206
        %372 = vmatprep.subr.mxu0 0.0
        %373 = vmatpush1.msra.mxu0 %v207
        %374 = vmatprep.subr.mxu0 0.0
        %375 = vmatpush1.msra.mxu0 %v208
        %376 = vmatprep.mubr.f32.mxu0 %v170
        %377 = vmatmul.mubr.f32.gmra.mrb[0].mxu0 %v169
        %v378 = vpop.f32.mrb[0].mxu0
        %v379 = vadd.f32 %v310, %v378
        %v380 = vpop.f32.mrb[0].mxu0
        %381 = vdwg.mxu0
        %382 = vmatprep.subr.mxu0 0.0
        %383 = vmatpush1.msra.mxu0 %v209
        %384 = vmatprep.subr.mxu0 0.0
        %385 = vmatpush1.msra.mxu0 %v210
        %386 = vmatprep.subr.mxu0 0.0
        %387 = vmatpush1.msra.mxu0 %v211
        %388 = vmatprep.subr.mxu0 0.0
        %389 = vmatpush1.msra.mxu0 %v212
        %390 = vmatprep.subr.mxu0 0.0
        %391 = vmatpush1.msra.mxu0 %v213
        %392 = vmatprep.subr.mxu0 0.0
        %393 = vmatpush1.msra.mxu0 %v214
        %394 = vmatprep.subr.mxu0 0.0
        %395 = vmatpush1.msra.mxu0 %v215
        %396 = vmatprep.subr.mxu0 0.0
        %397 = vmatpush1.msra.mxu0 %v216
        %398 = vmatprep.subr.mxu0 0.0
        %399 = vmatpush1.msra.mxu0 %v217
        %400 = vmatprep.subr.mxu0 0.0
        %401 = vmatpush1.msra.mxu0 %v218
        %402 = vmatprep.subr.mxu0 0.0
        %403 = vmatpush1.msra.mxu0 %v219
        %404 = vmatprep.subr.mxu0 0.0
        %405 = vmatpush1.msra.mxu0 %v220
        %406 = vmatprep.subr.mxu0 0.0
        %407 = vmatpush1.msra.mxu0 %v221
        %408 = vmatprep.subr.mxu0 0.0
        %409 = vmatpush1.msra.mxu0 %v222
        %410 = vmatprep.subr.mxu0 0.0
        %411 = vmatpush1.msra.mxu0 %v223
        %412 = vmatprep.subr.mxu0 0.0
        %413 = vmatpush1.msra.mxu0 %v224
        %414 = vmatprep.subr.mxu0 0.0
        %415 = vmatpush1.msra.mxu0 %v225
        %416 = vmatprep.subr.mxu0 0.0
        %417 = vmatpush1.msra.mxu0 %v226
        %418 = vmatprep.subr.mxu0 0.0
        %419 = vmatpush1.msra.mxu0 %v227
        %420 = vmatprep.subr.mxu0 0.0
        %421 = vmatpush1.msra.mxu0 %v228
        %422 = vmatprep.subr.mxu0 0.0
        %423 = vmatpush1.msra.mxu0 %v229
        %424 = vmatprep.subr.mxu0 0.0
        %425 = vmatpush1.msra.mxu0 %v230
        %426 = vmatprep.subr.mxu0 0.0
        %427 = vmatpush1.msra.mxu0 %v231
        %428 = vmatprep.subr.mxu0 0.0
        %429 = vmatpush1.msra.mxu0 %v232
        %430 = vmatprep.subr.mxu0 0.0
        %431 = vmatpush1.msra.mxu0 %v233
        %432 = vmatprep.subr.mxu0 0.0
        %433 = vmatpush1.msra.mxu0 %v234
        %434 = vmatprep.subr.mxu0 0.0
        %435 = vmatpush1.msra.mxu0 %v235
        %436 = vmatprep.subr.mxu0 0.0
        %437 = vmatpush1.msra.mxu0 %v236
        %438 = vmatprep.subr.mxu0 0.0
        %439 = vmatpush1.msra.mxu0 %v237
        %440 = vmatprep.subr.mxu0 0.0
        %441 = vmatpush1.msra.mxu0 %v238
        %442 = vmatprep.subr.mxu0 0.0
        %443 = vmatpush1.msra.mxu0 %v239
        %444 = vmatprep.subr.mxu0 0.0
        %445 = vmatpush1.msra.mxu0 %v240
        %446 = vmatprep.mubr.f32.mxu0 %v172
        %447 = vmatmul.mubr.f32.gmra.mrb[0].mxu0 %v171
        %v448 = vpop.f32.mrb[0].mxu0
        %v449 = vadd.f32 %v379, %v448
        %v450 = vpop.f32.mrb[0].mxu0
        %451 = vdwg.mxu0
        %452 = vmatprep.subr.mxu0 0.0
        %453 = vmatpush1.msra.mxu0 %v241
        %454 = vmatprep.subr.mxu0 0.0
        %455 = vmatpush1.msra.mxu0 %v242
        %456 = vmatprep.subr.mxu0 0.0
        %457 = vmatpush1.msra.mxu0 %v243
        %458 = vmatprep.subr.mxu0 0.0
        %459 = vmatpush1.msra.mxu0 %v244
        %460 = vmatprep.subr.mxu0 0.0
        %461 = vmatpush1.msra.mxu0 %v245
        %462 = vmatprep.subr.mxu0 0.0
        %463 = vmatpush1.msra.mxu0 %v246
        %464 = vmatprep.subr.mxu0 0.0
        %465 = vmatpush1.msra.mxu0 %v247
        %466 = vmatprep.subr.mxu0 0.0
        %467 = vmatpush1.msra.mxu0 %v248
        %468 = vmatprep.subr.mxu0 0.0
        %469 = vmatpush1.msra.mxu0 %v249
        %470 = vmatprep.subr.mxu0 0.0
        %471 = vmatpush1.msra.mxu0 %v250
        %472 = vmatprep.subr.mxu0 0.0
        %473 = vmatpush1.msra.mxu0 %v251
        %474 = vmatprep.subr.mxu0 0.0
        %475 = vmatpush1.msra.mxu0 %v252
        %476 = vmatprep.subr.mxu0 0.0
        %477 = vmatpush1.msra.mxu0 %v253
        %478 = vmatprep.subr.mxu0 0.0
        %479 = vmatpush1.msra.mxu0 %v254
        %480 = vmatprep.subr.mxu0 0.0
        %481 = vmatpush1.msra.mxu0 %v255
        %482 = vmatprep.subr.mxu0 0.0
        %483 = vmatpush1.msra.mxu0 %v256
        %484 = vmatprep.subr.mxu0 0.0
        %485 = vmatpush1.msra.mxu0 %v257
        %486 = vmatprep.subr.mxu0 0.0
        %487 = vmatpush1.msra.mxu0 %v258
        %488 = vmatprep.subr.mxu0 0.0
        %489 = vmatpush1.msra.mxu0 %v259
        %490 = vmatprep.subr.mxu0 0.0
        %491 = vmatpush1.msra.mxu0 %v260
        %492 = vmatprep.subr.mxu0 0.0
        %493 = vmatpush1.msra.mxu0 %v261
        %494 = vmatprep.subr.mxu0 0.0
        %495 = vmatpush1.msra.mxu0 %v262
        %496 = vmatprep.subr.mxu0 0.0
        %497 = vmatpush1.msra.mxu0 %v263
        %498 = vmatprep.subr.mxu0 0.0
        %499 = vmatpush1.msra.mxu0 %v264
        %500 = vmatprep.subr.mxu0 0.0
        %501 = vmatpush1.msra.mxu0 %v265
        %502 = vmatprep.subr.mxu0 0.0
        %503 = vmatpush1.msra.mxu0 %v266
        %504 = vmatprep.subr.mxu0 0.0
        %505 = vmatpush1.msra.mxu0 %v267
        %506 = vmatprep.subr.mxu0 0.0
        %507 = vmatpush1.msra.mxu0 %v268
        %508 = vmatprep.subr.mxu0 0.0
        %509 = vmatpush1.msra.mxu0 %v269
        %510 = vmatprep.subr.mxu0 0.0
        %511 = vmatpush1.msra.mxu0 %v270
        %512 = vmatprep.subr.mxu0 0.0
        %513 = vmatpush1.msra.mxu0 %v271
        %514 = vmatprep.subr.mxu0 0.0
        %515 = vmatpush1.msra.mxu0 %v272
        %516 = vmatprep.mubr.f32.mxu0 %v174
        %517 = vmatmul.mubr.f32.gmra.mrb[0].mxu0 %v173
        %v518 = vpop.f32.mrb[0].mxu0
        %v519 = vadd.f32 %v449, %v518
        %v520 = vpop.f32.mrb[0].mxu0
        %521 = vdwg.mxu0
        %522 = vmatprep.subr.mxu0 0.0
        %523 = vmatpush1.msra.mxu0 %v273
        %524 = vmatprep.subr.mxu0 0.0
        %525 = vmatpush1.msra.mxu0 %v274
        %526 = vmatprep.subr.mxu0 0.0
        %527 = vmatpush1.msra.mxu0 %v275
        %528 = vmatprep.subr.mxu0 0.0
        %529 = vmatpush1.msra.mxu0 %v276
        %530 = vmatprep.subr.mxu0 0.0
        %531 = vmatpush1.msra.mxu0 %v277
        %532 = vmatprep.subr.mxu0 0.0
        %533 = vmatpush1.msra.mxu0 %v278
        %534 = vmatprep.subr.mxu0 0.0
        %535 = vmatpush1.msra.mxu0 %v279
        %536 = vmatprep.subr.mxu0 0.0
        %537 = vmatpush1.msra.mxu0 %v280
        %538 = vmatprep.subr.mxu0 0.0
        %539 = vmatpush1.msra.mxu0 %v281
        %540 = vmatprep.subr.mxu0 0.0
        %541 = vmatpush1.msra.mxu0 %v282
        %542 = vmatprep.subr.mxu0 0.0
        %543 = vmatpush1.msra.mxu0 %v283
        %544 = vmatprep.subr.mxu0 0.0
        %545 = vmatpush1.msra.mxu0 %v284
        %546 = vmatprep.subr.mxu0 0.0
        %547 = vmatpush1.msra.mxu0 %v285
        %548 = vmatprep.subr.mxu0 0.0
        %549 = vmatpush1.msra.mxu0 %v286
        %550 = vmatprep.subr.mxu0 0.0
        %551 = vmatpush1.msra.mxu0 %v287
        %552 = vmatprep.subr.mxu0 0.0
        %553 = vmatpush1.msra.mxu0 %v288
        %554 = vmatprep.subr.mxu0 0.0
        %555 = vmatpush1.msra.mxu0 %v289
        %556 = vmatprep.subr.mxu0 0.0
        %557 = vmatpush1.msra.mxu0 %v290
        %558 = vmatprep.subr.mxu0 0.0
        %559 = vmatpush1.msra.mxu0 %v291
        %560 = vmatprep.subr.mxu0 0.0
        %561 = vmatpush1.msra.mxu0 %v292
        %562 = vmatprep.subr.mxu0 0.0
        %563 = vmatpush1.msra.mxu0 %v293
        %564 = vmatprep.subr.mxu0 0.0
        %565 = vmatpush1.msra.mxu0 %v294
        %566 = vmatprep.subr.mxu0 0.0
        %567 = vmatpush1.msra.mxu0 %v295
        %568 = vmatprep.subr.mxu0 0.0
        %569 = vmatpush1.msra.mxu0 %v296
        %570 = vmatprep.subr.mxu0 0.0
        %571 = vmatpush1.msra.mxu0 %v297
        %572 = vmatprep.subr.mxu0 0.0
        %573 = vmatpush1.msra.mxu0 %v298
        %574 = vmatprep.subr.mxu0 0.0
        %575 = vmatpush1.msra.mxu0 %v299
        %576 = vmatprep.subr.mxu0 0.0
        %577 = vmatpush1.msra.mxu0 %v300
        %578 = vmatprep.subr.mxu0 0.0
        %579 = vmatpush1.msra.mxu0 %v301
        %580 = vmatprep.subr.mxu0 0.0
        %581 = vmatpush1.msra.mxu0 %v302
        %582 = vmatprep.subr.mxu0 0.0
        %583 = vmatpush1.msra.mxu0 %v303
        %584 = vmatprep.subr.mxu0 0.0
        %585 = vmatpush1.msra.mxu0 %v304
        %586 = vmatprep.mubr.f32.mxu0 %v176
        %587 = vmatmul.mubr.f32.gmra.mrb[0].mxu0 %v175
        %v588 = vpop.f32.mrb[0].mxu0
        %v589 = vadd.f32 %v519, %v588
        %v590 = vpop.f32.mrb[0].mxu0
        %591 = vdwg.mxu0
        %vm592 = vcmask 523264
        %593 = vst.msk [vmem:[%s163] sm:$0xff] %vm592, %v589
        %s594 = sand.u32 %s93, 1
        %s595 = scalar_lea.sflag [#allocation3], %s594
        %s596 = sand.u32 %s93, 1
        %s597 = smul.addr %s596, 8
        %s598 = scalar_lea.vmem [#allocation2], %s597
        // Predicated region
        $region33: #{tpu_custom_call.1} parent=31 // pred_check
          %p599 = pneg %p103
        $region34: #{tpu_custom_call.1} parent=31 // pred_check_branch
          %601 = sbr.rel (%p599) target = $region36
        $region35: #{tpu_custom_call.1} parent=31 // pred_region
          %s603 = ssub.s32 128, 128
          %604 = vsyncadd %s595, %s603
          %s605 = smul.addr %s17, 128
          %s606 = scalar_lea.hbm %s3, %s605
          %s608 = sshll.u32 %s598, 4
          %s609 = int_to_ptr.vmem [resolvable:$true] %s608
          %611 = dma.vmem_to_hbm [thread:$0]  %s609, 128, %s606, %s595
        $region36: #{tpu_custom_call.1} parent=31 // pred_fallthru
          _
      $region32: #{tpu_custom_call.1} parent=5 // pred_fallthru
        _
      %p612 = scmp.le.s32.totalorder 2, %s12
      // Predicated region
      $region37: #{tpu_custom_call.1} parent=5 // pred_check
        %p613 = pneg %p612
      $region38: #{tpu_custom_call.1} parent=5 // pred_check_branch
        %615 = sbr.rel (%p613) target = $region40
      $region39: #{tpu_custom_call.1} parent=5 // pred_region
        %s616 = ssub.s32 %s12, 2
        // Predicated region
        $region41: #{tpu_custom_call.1} parent=39 // pred_check
          %p617 = pneg %p109
        $region42: #{tpu_custom_call.1} parent=39 // pred_check_branch
          %619 = sbr.rel (%p617) target = $region44
        $region43: #{tpu_custom_call.1} parent=39 // pred_region
          %s620 = sand.u32 %s94, 1
          %s621 = scalar_lea.sflag [#allocation3], %s620
          %s622 = sand.u32 %s94, 1
          %s623 = smul.addr %s622, 8
          %s624 = scalar_lea.vmem [#allocation2], %s623
          %625 = dma.done %s621, 128
        $region44: #{tpu_custom_call.1} parent=39 // pred_fallthru
          _
      $region40: #{tpu_custom_call.1} parent=5 // pred_fallthru
        _
    $region6: #{tpu_custom_call.1} parent=1 // loop_footer
      %s16 = sadd.s32 1, %s12
    $region7: #{tpu_custom_call.1} parent=1 // loop_footer_branch
      %11 = sbr.rel target = $region3
    $region8: #{tpu_custom_call.1} parent=1 // loop_exit
      _
    %626 = vsyncpa [#allocation3], 1
    %s627 = scalar_lea.sflag [#allocation3], 1
    %628 = vsyncpa %s627, 1

</llo_original>
